<compile_context>
chip_gen: v5e
topology: v5e:2x2
jax: 0.10.0
libtpu: 0.0.40
codegen_flags: <defaults>
</compile_context>

<pallas_src>
import functools

import jax
import jax.numpy as jnp
from jax.experimental import pallas as pl
from jax.experimental.pallas import tpu as pltpu


def _round_up(v, m):
    return ((v + m - 1) // m) * m


def _linear_mixture_kernel(x_ref, w_ref, scale_ref, bias_ref, o_ref, *, mxu_dtype):
    # f32 scale multiply (preserves alpha-mixture precision; VPU work rides free
    # under the MXU), then a single cast to the MXU dtype for the matmul.
    x_s = (x_ref[...].astype(jnp.float32) * scale_ref[...]).astype(mxu_dtype)
    acc = jax.lax.dot_general(
        x_s, w_ref[...],
        dimension_numbers=(((1,), (0,)), ((), ())),
        preferred_element_type=jnp.float32,
    )
    o_ref[...] = (acc + bias_ref[...]).astype(o_ref.dtype)


def prepare_linear_mixture_params(op_weight, op_bias, compute_dtype=jnp.bfloat16):
    """One-time (per-module) prep, hoisted out of the per-call path.

    Transposes op_weight [O, K] -> [K, O], pads O to a lane multiple (128) so
    output stores are lane-dense, and casts the weight to the MXU dtype.
    """
    O, K = op_weight.shape
    Op = _round_up(O, 128)
    wT = jnp.pad(op_weight.T.astype(compute_dtype), ((0, 0), (0, Op - O)))
    if op_bias is None:
        bias2d = jnp.zeros((1, Op), jnp.float32)
    else:
        bias2d = jnp.pad(op_bias.astype(jnp.float32).reshape(1, O),
                         ((0, 0), (0, Op - O)))
    return {"wT": wT, "bias2d": bias2d, "K": K, "O": O, "mxu_dtype": compute_dtype}


def _choose_tm(M, tm, K, tn, x_item, out_item):
    if M <= 8:
        return M                              # full-dim block, no (8,) constraint
    tm = _round_up(tm, 8)
    tm_eff = min(tm, _round_up(M, 8))
    if pl.cdiv(M, tm_eff) < 2:                # give v7x's 2 TensorCores >=2 M-steps
        tm_eff = max(8, _round_up(pl.cdiv(M, 2), 8))
    # Keep the double-buffered x/out tiles inside a conservative VMEM budget.
    while tm_eff > 64 and (2 * tm_eff * K * x_item + 2 * tm_eff * tn * out_item) > (32 << 20):
        tm_eff = max(64, _round_up(tm_eff // 2, 8))
    return tm_eff


def linear_mixture_forward(x, weights, op_weight, op_bias, emb_choice_list,
                           use_argmax=False, tm=512, tn=None,
                           compute_dtype=None, prepared=None):
    """x: [..., K] with K == max(emb_choice_list); op_weight: [O, K]; op_bias: [O] or None.

    prepared: optional output of prepare_linear_mixture_params (hoist the weight
              relayout out of the per-call path; strongly recommended).
    compute_dtype: MXU input dtype (default bf16 when x is f32); f32 accumulation,
                   output keeps x.dtype.
    For best DMA efficiency K should be a multiple of 128 (AutoFormer embed dims
    that are not will still run correctly, with masked x loads).
    """
    max_emb = max(emb_choice_list)
    orig_shape = x.shape
    K = orig_shape[-1]
    assert K == max_emb, "input feature dim must equal max(emb_choice_list)"
    # TODO(synk): the PyTorch use_argmax path produces a data-dependent input
    # width (emb of the argmax choice); we keep static width max_emb and zero
    # the trailing scale columns, which is numerically equivalent.

    out_dtype = x.dtype
    if prepared is None:
        if compute_dtype is None:
            compute_dtype = jnp.bfloat16 if x.dtype == jnp.float32 else x.dtype
        prepared = prepare_linear_mixture_params(op_weight, op_bias, compute_dtype)
    assert prepared["K"] == K
    wT, bias2d = prepared["wT"], prepared["bias2d"]
    O, mxu_dtype = prepared["O"], prepared["mxu_dtype"]
    Op = wT.shape[1]

    # Per-column mixture scale in f32: scale[j] = sum_i alpha_i * 1[j < emb_i].
    col = jnp.arange(K)
    masks = jnp.stack([(col < e) for e in emb_choice_list]).astype(jnp.float32)
    w_f32 = jnp.asarray(weights, jnp.float32)
    if use_argmax:
        idx = jnp.argmax(w_f32)
        sel = jax.nn.one_hot(idx, len(emb_choice_list), dtype=jnp.float32) * w_f32
        scale = sel @ masks
    else:
        scale = w_f32 @ masks
    scale2d = scale.reshape(1, K)              # stays f32 (cast happens in-kernel)

    x2d = x.reshape(-1, K)
    M = x2d.shape[0]

    x_item = jnp.dtype(x.dtype).itemsize
    out_item = jnp.dtype(out_dtype).itemsize
    w_item = jnp.dtype(mxu_dtype).itemsize

    # O tiling: keep the weight resident unless it is large, then tile.
    if tn is None:
        tn = Op if K * Op * w_item <= (16 << 20) else 512
    tn = min(max(128, _round_up(tn, 128)), Op)
    o_steps = pl.cdiv(Op, tn)

    tm_eff = _choose_tm(M, tm, K, tn, x_item, out_item)
    m_steps = pl.cdiv(M, tm_eff)

    # Constant-index operands: single-buffer (no point double-buffering blocks
    # whose index never changes).
    w_mode = pl.Buffered(1) if o_steps == 1 else None
    b_mode = pl.Buffered(1) if o_steps == 1 else None

    # VMEM working set -> explicit (generation-safe) limit, capped at 48 MiB.
    w_bufs = 1 if o_steps == 1 else 2
    vmem_need = (2 * tm_eff * K * x_item
                 + w_bufs * K * tn * w_item
                 + 2 * tm_eff * tn * out_item
                 + 2 * (K + tn) * 4)
    vmem_limit = min(max(int(vmem_need * 1.25) + (2 << 20), 8 << 20), 48 << 20)

    cost = pl.CostEstimate(
        flops=2 * M * Op * K,
        transcendentals=0,
        bytes_accessed=M * K * x_item + K * Op * w_item + M * Op * out_item
                       + (K + Op) * 4,
    )

    kernel = functools.partial(_linear_mixture_kernel, mxu_dtype=mxu_dtype)

    out = pl.pallas_call(
        kernel,
        out_shape=jax.ShapeDtypeStruct((M, Op), out_dtype),
        grid_spec=pltpu.PrefetchScalarGridSpec(
            num_scalar_prefetch=0,
            grid=(m_steps, o_steps),
            in_specs=[
                pl.BlockSpec((tm_eff, K), lambda i, j: (i, 0)),             # x tile
                pl.BlockSpec((K, tn), lambda i, j: (0, j),
                             pipeline_mode=w_mode),                         # W^T
                pl.BlockSpec((1, K), lambda i, j: (0, 0),
                             pipeline_mode=pl.Buffered(1)),                 # scale
                pl.BlockSpec((1, tn), lambda i, j: (0, j),
                             pipeline_mode=b_mode),                         # bias
            ],
            out_specs=pl.BlockSpec((tm_eff, tn), lambda i, j: (i, j)),
        ),
        compiler_params=pltpu.CompilerParams(
            dimension_semantics=("parallel", "parallel"),
            vmem_limit_bytes=vmem_limit,
        ),
        cost_estimate=cost,
    )(x2d, wT, scale2d, bias2d)

    return out[:, :O].reshape(*orig_shape[:-1], O)


def _reference(x, weights, op_weight, op_bias, emb_choice_list):
    max_emb = max(emb_choice_list)
    conv_weight = jnp.zeros_like(op_weight[:, :max_emb])
    for i, emb in enumerate(emb_choice_list):
        w_curr = weights[i] * op_weight[:, :emb]
        pad = max_emb - emb
        conv_weight = conv_weight + jnp.pad(w_curr, ((0, 0), (0, pad)))
    return x @ conv_weight.T + op_bias


if __name__ == "__main__":
    key = jax.random.PRNGKey(0)
    k1, k2, k3, k4 = jax.random.split(key, 4)

    # Small transformer-ish shapes: batch=2, seq=8, hidden choices up to 32.
    emb_choice_list = [16, 24, 32]
    max_emb = max(emb_choice_list)       # in_features of the nn.Linear
    out_features = 64
    B, S = 2, 8

    # Deterministic "module" parameters (nn.Linear(max_emb, out_features)).
    op_weight = jax.random.normal(k1, (out_features, max_emb), jnp.float32) * 0.05
    op_bias = jax.random.normal(k2, (out_features,), jnp.float32) * 0.01

    # Architecture mixture weights (softmax over choices) and input.
    weights = jax.nn.softmax(jax.random.normal(k3, (len(emb_choice_list),)))
    x = jax.random.normal(k4, (B, S, max_emb), jnp.float32)

    y_ref = _reference(x.reshape(-1, max_emb), weights, op_weight, op_bias,
                       emb_choice_list).reshape(B, S, out_features)

    # 1) f32 MXU path — tight check against the pure-JAX reference.
    y32 = linear_mixture_forward(x, weights, op_weight, op_bias, emb_choice_list,
                                 compute_dtype=jnp.float32)
    y32 = jax.block_until_ready(y32)
    assert y32.shape == (B, S, out_features)
    assert jnp.allclose(y32, y_ref, atol=1e-4, rtol=1e-4)

    # 2) Default bf16 MXU path with hoisted (prepared) weights — loose check.
    prepared = prepare_linear_mixture_params(op_weight, op_bias)
    ybf = linear_mixture_forward(x, weights, op_weight, op_bias, emb_choice_list,
                                 prepared=prepared)
    ybf = jax.block_until_ready(ybf)
    assert ybf.shape == (B, S, out_features)
    assert jnp.allclose(ybf, y_ref, atol=3e-2, rtol=3e-2)

    print("KERNEL_OK")
</pallas_src>

<mosaic_0001>
module attributes {stable_mosaic.version = 11 : i64} {
  func.func @_linear_mixture_kernel(%arg0: i32, %arg1: i32, %arg2: memref<8x32xf32, #tpu.memory_space<vmem>>, %arg3: memref<32x128xf32, #tpu.memory_space<vmem>>, %arg4: memref<1x32xf32, #tpu.memory_space<vmem>>, %arg5: memref<1x128xf32, #tpu.memory_space<vmem>>, %arg6: memref<8x128xf32, #tpu.memory_space<vmem>>) attributes {dimension_semantics = [#tpu.dimension_semantics<parallel>, #tpu.dimension_semantics<parallel>], iteration_bounds = array<i64: 2, 1>, scalar_prefetch = 0 : i64, scratch_operands = 0 : i64, tpu.core_type = #tpu.core_type<tc>, window_params = [{transform_indices = @transform_0, window_bounds = array<i64: 8, 32>}, {pipeline_mode = #tpu.pipeline_mode<synchronous>, transform_indices = @transform_1, window_bounds = array<i64: 32, 128>}, {pipeline_mode = #tpu.pipeline_mode<synchronous>, transform_indices = @transform_2, window_bounds = array<i64: 1, 32>}, {pipeline_mode = #tpu.pipeline_mode<synchronous>, transform_indices = @transform_3, window_bounds = array<i64: 1, 128>}, {transform_indices = @transform_4, window_bounds = array<i64: 8, 128>}]} {
    %c0 = arith.constant 0 : index
    %c0_0 = arith.constant 0 : index
    %0 = vector.load %arg2[%c0, %c0_0] : memref<8x32xf32, #tpu.memory_space<vmem>>, vector<8x32xf32>
    %c0_1 = arith.constant 0 : index
    %c0_2 = arith.constant 0 : index
    %1 = vector.load %arg4[%c0_1, %c0_2] : memref<1x32xf32, #tpu.memory_space<vmem>>, vector<1x32xf32>
    %2 = vector.broadcast %1 : vector<1x32xf32> to vector<8x32xf32>
    %3 = arith.mulf %0, %2 : vector<8x32xf32>
    %c0_3 = arith.constant 0 : index
    %c0_4 = arith.constant 0 : index
    %4 = vector.load %arg3[%c0_3, %c0_4] : memref<32x128xf32, #tpu.memory_space<vmem>>, vector<32x128xf32>
    %cst = arith.constant dense<0.000000e+00> : vector<8x128xf32>
    %5 = tpu.matmul %3, %4, %cst {dimension_numbers = #tpu.dot_dimension_numbers<[1], [0], [0], [1], [0, 0, 1, 1], [], []>} : vector<8x32xf32>, vector<32x128xf32>, vector<8x128xf32> -> vector<8x128xf32>
    %c0_5 = arith.constant 0 : index
    %c0_6 = arith.constant 0 : index
    %6 = vector.load %arg5[%c0_5, %c0_6] : memref<1x128xf32, #tpu.memory_space<vmem>>, vector<1x128xf32>
    %7 = vector.broadcast %6 : vector<1x128xf32> to vector<8x128xf32>
    %8 = arith.addf %5, %7 : vector<8x128xf32>
    %c0_7 = arith.constant 0 : index
    %c0_8 = arith.constant 0 : index
    %9 = vector.load %arg6[%c0_7, %c0_8] : memref<8x128xf32, #tpu.memory_space<vmem>>, vector<8x128xf32>
    tpu.vector_store %arg6[%c0_7, %c0_8], %8 {strides = array<i32>} : memref<8x128xf32, #tpu.memory_space<vmem>>, vector<8x128xf32>,
    return
  }
  func.func @transform_0(%arg0: i32, %arg1: i32) -> (i32, i32) {
    %c0_i32 = arith.constant 0 : i32
    %c0_i32_0 = arith.constant 0 : i32
    return %arg0, %c0_i32 : i32, i32
  }
  func.func @transform_1(%arg0: i32, %arg1: i32) -> (i32, i32) {
    %c0_i32 = arith.constant 0 : i32
    %c0_i32_0 = arith.constant 0 : i32
    return %c0_i32, %arg1 : i32, i32
  }
  func.func @transform_2(%arg0: i32, %arg1: i32) -> (i32, i32) {
    %c0_i32 = arith.constant 0 : i32
    %c0_i32_0 = arith.constant 0 : i32
    %c0_i32_1 = arith.constant 0 : i32
    return %c0_i32, %c0_i32_0 : i32, i32
  }
  func.func @transform_3(%arg0: i32, %arg1: i32) -> (i32, i32) {
    %c0_i32 = arith.constant 0 : i32
    %c0_i32_0 = arith.constant 0 : i32
    return %c0_i32, %arg1 : i32, i32
  }
  func.func @transform_4(%arg0: i32, %arg1: i32) -> (i32, i32) {
    %c0_i32 = arith.constant 0 : i32
    return %arg0, %arg1 : i32, i32
  }
}

</mosaic_0001>

<llo_original>
// kernel: tpu_custom_call.1
$region0: #{tpu_custom_call.1}
  #allocation0 [shape = 'u32[]', space=smem, size = 0x4, offset = 0x4, fixed_abs, tag = 'smem constant byte address 0x4 - core index']
  #allocation1 [shape = 'u32[72,128]{1,0:T(1,128)}', space=vmem, size = 0x9000, scoped, tag = 'internal scratch']
  %s0 = inlined_call_operand.hbm [shape: f32[16,32], index: 0, kind: input, shape index: {}]
  %s1 = inlined_call_operand.hbm [shape: f32[32,128], index: 1, kind: input, shape index: {}]
  %s2 = inlined_call_operand.vmem [shape: f32[1,32], index: 2, kind: input, shape index: {}]
  %s3 = inlined_call_operand.vmem [shape: f32[1,128], index: 3, kind: input, shape index: {}]
  %s4 = inlined_call_operand.hbm [shape: f32[16,128], index: 4, kind: output, shape index: {}]
  %s5 = sld [smem:[#allocation0]]
  $region57: #{tpu_custom_call.1} parent=0
    _
  %s7 = ssub.s32 1, %s5
  %s8 = scalar_select 0, %s7, %s5
  $region1: #{tpu_custom_call.1} parent=0
    #allocation2 [shape = 'u8[8192]{0}', space=vmem, size = 0x2000, scoped, tag = 'input window, operand 0']
    #allocation3 [shape = 's32[2]{0}', space=sflag, size = 0x8, scoped, tag = 'scoped memory for tpu_custom_call.1']
    #allocation4 [shape = 's32[2]{0}', space=sflag, size = 0x8, scoped, tag = 'scoped memory for tpu_custom_call.1']
    #allocation5 [shape = 'u8[16384]{0}', space=vmem, size = 0x4000, scoped, tag = 'input window, operand 1, single buffered']
    #allocation6 [shape = 's32[1]{0}', space=sflag, size = 0x4, scoped, tag = 'scoped memory for tpu_custom_call.1']
    #allocation7 [shape = 'u8[8192]{0}', space=vmem, size = 0x2000, scoped, tag = 'output window, operand 0']
    %9 = vsyncpa [#allocation3], 0
    %s10 = scalar_lea.sflag [#allocation3], 1
    %11 = vsyncpa %s10, 0
    %12 = vsyncpa [#allocation6], 0
    %13 = vsyncpa [#allocation4], 0
    %s14 = scalar_lea.sflag [#allocation4], 1
    %15 = vsyncpa %s14, 0
    loop: start=0, step=1, limit=4
    $region2: #{tpu_custom_call.1} parent=1 // loop_pre_header
      _
    $region3: #{tpu_custom_call.1} parent=1 // loop_header
      %s17 = sphi 0, %s21
      %p18 = scmp.ge.s32.totalorder %s17, 4
      %s24 = sphi 0, %s36
      %s25 = sphi 0, %s32
      %s26 = sphi 0, %s24
      %s27 = sphi 0, %s25
      %s28 = sphi 0, %s26
      %s29 = sphi 0, %s27
      %s39 = sphi 0, %s41
      %s42 = sphi 0, %s39
      %s43 = sphi 0, %s42
      %s59 = sphi 0, %s43
      %s65 = sphi 0, %s67
      %s68 = sphi 0, %s65
      %s69 = sphi 0, %s68
      %s85 = sphi 0, %s69
      %s89 = sphi 0, %s89
      %s91 = sphi 0, %s89
      %s92 = sphi 0, %s91
      %s106 = sphi 0, %s92
      %s112 = sphi 0, %s114
      %s115 = sphi 0, %s112
      %s116 = sphi 0, %s115
      %s132 = sphi 0, %s116
      %s140 = sphi 0, %s142
      %s143 = sphi 0, %s140
      %s144 = sphi 0, %s143
      %s160 = sphi 0, %s144
    $region4: #{tpu_custom_call.1} parent=1 // loop_header_branch
      %20 = sbr.rel (%p18) target = $region8
    $region5: #{tpu_custom_call.1} parent=1 // loop_body
      %s22 = ssub.s32 %s17, 1
      %s23 = ssub.s32 %s17, 2
      %s30 = sadd.s32 1, %s25
      %p31 = scmp.ge.s32.totalorder %s30, 1
      %s32 = scalar_select %p31, 0, %s30
      %s33 = sadd.s32 1, %s24
      %s34 = scalar_select %p31, %s33, %s24
      %p35 = scmp.ge.s32.totalorder %s34, 2
      %s36 = scalar_select %p35, 0, %s34
      %s37 = ssub.s32 %s24, %s36
      %p38 = scmp.eq.s32.totalorder %s37, 0
      %s40 = sadd.s32 %s39, 1
      %s41 = scalar_select %p38, %s39, %s40
      %p44 = pneg %p38
      %p45 = scmp.eq.s32.totalorder %s17, 1
      %p46 = por %p44, %p45
      %p47 = scmp.ne.s32.totalorder %s39, %s42
      %p48 = scmp.eq.s32.totalorder %s17, 0
      %p49 = por %p47, %p48
      %p50 = scmp.ne.s32.totalorder %s39, %s42
      %p51 = scmp.eq.s32.totalorder %s22, 1
      %p52 = por %p50, %p51
      %p53 = scmp.ne.s32.totalorder %s42, %s43
      %p54 = scmp.eq.s32.totalorder %s22, 0
      %p55 = por %p53, %p54
      %p56 = scmp.ne.s32.totalorder %s42, %s43
      %p57 = scmp.eq.s32.totalorder %s23, 1
      %p58 = por %p56, %p57
      %p60 = scmp.ne.s32.totalorder %s43, %s59
      %p61 = scmp.eq.s32.totalorder %s23, 0
      %p62 = por %p60, %p61
      %s63 = ssub.s32 %s25, %s32
      %p64 = scmp.eq.s32.totalorder %s63, 0
      %s66 = sadd.s32 %s65, 1
      %s67 = scalar_select %p64, %s65, %s66
      %p70 = pneg %p64
      %p71 = scmp.eq.s32.totalorder %s17, 1
      %p72 = por %p70, %p71
      %p73 = scmp.ne.s32.totalorder %s65, %s68
      %p74 = scmp.eq.s32.totalorder %s17, 0
      %p75 = por %p73, %p74
      %p76 = scmp.ne.s32.totalorder %s65, %s68
      %p77 = scmp.eq.s32.totalorder %s22, 1
      %p78 = por %p76, %p77
      %p79 = scmp.ne.s32.totalorder %s68, %s69
      %p80 = scmp.eq.s32.totalorder %s22, 0
      %p81 = por %p79, %p80
      %p82 = scmp.ne.s32.totalorder %s68, %s69
      %p83 = scmp.eq.s32.totalorder %s23, 1
      %p84 = por %p82, %p83
      %p86 = scmp.ne.s32.totalorder %s69, %s85
      %p87 = scmp.eq.s32.totalorder %s23, 0
      %p88 = por %p86, %p87
      %s90 = sadd.s32 %s89, 1
      %p93 = scmp.eq.s32.totalorder %s17, 1
      %p94 = scmp.ne.s32.totalorder %s89, %s91
      %p95 = scmp.eq.s32.totalorder %s17, 0
      %p96 = por %p94, %p95
      %p97 = scmp.ne.s32.totalorder %s89, %s91
      %p98 = scmp.eq.s32.totalorder %s22, 1
      %p99 = por %p97, %p98
      %p100 = scmp.ne.s32.totalorder %s91, %s92
      %p101 = scmp.eq.s32.totalorder %s22, 0
      %p102 = por %p100, %p101
      %p103 = scmp.ne.s32.totalorder %s91, %s92
      %p104 = scmp.eq.s32.totalorder %s23, 1
      %p105 = por %p103, %p104
      %p107 = scmp.ne.s32.totalorder %s92, %s106
      %p108 = scmp.eq.s32.totalorder %s23, 0
      %p109 = por %p107, %p108
      %s110 = ssub.s32 %s25, %s32
      %p111 = scmp.eq.s32.totalorder %s110, 0
      %s113 = sadd.s32 %s112, 1
      %s114 = scalar_select %p111, %s112, %s113
      %p117 = pneg %p111
      %p118 = scmp.eq.s32.totalorder %s17, 1
      %p119 = por %p117, %p118
      %p120 = scmp.ne.s32.totalorder %s112, %s115
      %p121 = scmp.eq.s32.totalorder %s17, 0
      %p122 = por %p120, %p121
      %p123 = scmp.ne.s32.totalorder %s112, %s115
      %p124 = scmp.eq.s32.totalorder %s22, 1
      %p125 = por %p123, %p124
      %p126 = scmp.ne.s32.totalorder %s115, %s116
      %p127 = scmp.eq.s32.totalorder %s22, 0
      %p128 = por %p126, %p127
      %p129 = scmp.ne.s32.totalorder %s115, %s116
      %p130 = scmp.eq.s32.totalorder %s23, 1
      %p131 = por %p129, %p130
      %p133 = scmp.ne.s32.totalorder %s116, %s132
      %p134 = scmp.eq.s32.totalorder %s23, 0
      %p135 = por %p133, %p134
      %s136 = ssub.s32 %s24, %s36
      %s137 = ssub.s32 %s25, %s32
      %s138 = sor.u32 %s136, %s137
      %p139 = scmp.eq.s32.totalorder %s138, 0
      %s141 = sadd.s32 %s140, 1
      %s142 = scalar_select %p139, %s140, %s141
      %p145 = pneg %p139
      %p146 = scmp.eq.s32.totalorder %s17, 1
      %p147 = por %p145, %p146
      %p148 = scmp.ne.s32.totalorder %s140, %s143
      %p149 = scmp.eq.s32.totalorder %s17, 0
      %p150 = por %p148, %p149
      %p151 = scmp.ne.s32.totalorder %s140, %s143
      %p152 = scmp.eq.s32.totalorder %s22, 1
      %p153 = por %p151, %p152
      %p154 = scmp.ne.s32.totalorder %s143, %s144
      %p155 = scmp.eq.s32.totalorder %s22, 0
      %p156 = por %p154, %p155
      %p157 = scmp.ne.s32.totalorder %s143, %s144
      %p158 = scmp.eq.s32.totalorder %s23, 1
      %p159 = por %p157, %p158
      %p161 = scmp.ne.s32.totalorder %s144, %s160
      %p162 = scmp.eq.s32.totalorder %s23, 0
      %p163 = por %p161, %p162
      %p164 = scmp.le.s32.totalorder 1, %s17
      %p165 = scmp.lt.s32.totalorder %s17, 3
      %p166 = pnand %p164, %p165
      %p167 = pneg %p166
      // Predicated region
      $region9: #{tpu_custom_call.1} parent=5 // pred_check
        _
      $region10: #{tpu_custom_call.1} parent=5 // pred_check_branch
        %169 = sbr.rel (%p166) target = $region12
      $region11: #{tpu_custom_call.1} parent=5 // pred_region
        %s170 = ssub.s32 %s17, 1
        // Predicated region
        $region13: #{tpu_custom_call.1} parent=11 // pred_check
          %p171 = pneg %p81
        $region14: #{tpu_custom_call.1} parent=11 // pred_check_branch
          %173 = sbr.rel (%p171) target = $region16
        $region15: #{tpu_custom_call.1} parent=11 // pred_region
          %175 = vsyncadd [#allocation6], 0
          %s176 = smul.addr %s27, 8
          %s177 = scalar_lea.hbm %s1, %s176
          %s178 = sshll.u32 %s177, 4
          %s179 = int_to_ptr.hbm [resolvable:$true] %s178
          %s180 = sshll.u32 [#allocation5], 4
          %s181 = int_to_ptr.vmem [resolvable:$true] %s180
          %186 = dma.hbm_to_vmem [thread:$0]  %s179, 512, %s181, [#allocation6], 128, 128, 8
        $region16: #{tpu_custom_call.1} parent=11 // pred_fallthru
          _
        // Predicated region
        $region17: #{tpu_custom_call.1} parent=11 // pred_check
          %p187 = pneg %p102
        $region18: #{tpu_custom_call.1} parent=11 // pred_check_branch
          %189 = sbr.rel (%p187) target = $region20
        $region19: #{tpu_custom_call.1} parent=11 // pred_region
          _
        $region20: #{tpu_custom_call.1} parent=11 // pred_fallthru
          _
        // Predicated region
        $region21: #{tpu_custom_call.1} parent=11 // pred_check
          %p190 = pneg %p128
        $region22: #{tpu_custom_call.1} parent=11 // pred_check_branch
          %192 = sbr.rel (%p190) target = $region24
        $region23: #{tpu_custom_call.1} parent=11 // pred_region
          %p193 = scmp.lt.s32.totalorder %s27, 0
          %s194 = scalar_select %p193, %s27, 0
          %s195 = scalar_lea.vmem %s3, %s194
        $region24: #{tpu_custom_call.1} parent=11 // pred_fallthru
          _
      $region12: #{tpu_custom_call.1} parent=5 // pred_fallthru
        _
      %p196 = scmp.lt.s32.totalorder %s17, 2
      // Predicated region
      $region25: #{tpu_custom_call.1} parent=5 // pred_check
        %p197 = pneg %p196
      $region26: #{tpu_custom_call.1} parent=5 // pred_check_branch
        %199 = sbr.rel (%p197) target = $region28
      $region27: #{tpu_custom_call.1} parent=5 // pred_region
        // Predicated region
        $region29: #{tpu_custom_call.1} parent=27 // pred_check
          %p200 = pneg %p49
        $region30: #{tpu_custom_call.1} parent=27 // pred_check_branch
          %202 = sbr.rel (%p200) target = $region32
        $region31: #{tpu_custom_call.1} parent=27 // pred_region
          %s203 = sand.u32 %s39, 1
          %s204 = scalar_lea.sflag [#allocation3], %s203
          %s205 = sand.u32 %s39, 1
          %s206 = smul.addr %s205, 8
          %s207 = scalar_lea.vmem [#allocation2], %s206
          %209 = vsyncadd %s204, 0
          %s210 = smul.addr %s24, 8
          %s211 = scalar_lea.hbm %s0, %s210
          %s213 = sshll.u32 %s211, 4
          %s214 = int_to_ptr.hbm [resolvable:$true] %s213
          %s215 = sshll.u32 %s207, 4
          %s216 = int_to_ptr.vmem [resolvable:$true] %s215
          %218 = dma.hbm_to_vmem [thread:$0]  %s214, 128, %s216, %s204
        $region32: #{tpu_custom_call.1} parent=27 // pred_fallthru
          _
      $region28: #{tpu_custom_call.1} parent=5 // pred_fallthru
        _
      %p219 = scmp.le.s32.totalorder 1, %s17
      %p220 = scmp.lt.s32.totalorder %s17, 3
      %p221 = pnand %p219, %p220
      %p222 = pneg %p221
      // Predicated region
      $region33: #{tpu_custom_call.1} parent=5 // pred_check
        _
      $region34: #{tpu_custom_call.1} parent=5 // pred_check_branch
        %224 = sbr.rel (%p221) target = $region36
      $region35: #{tpu_custom_call.1} parent=5 // pred_region
        %s225 = ssub.s32 %s17, 1
        %s226 = sand.u32 %s42, 1
        %s227 = scalar_lea.sflag [#allocation3], %s226
        %s228 = sand.u32 %s42, 1
        %s229 = smul.addr %s228, 8
        %s230 = scalar_lea.vmem [#allocation2], %s229
        // Predicated region
        $region37: #{tpu_custom_call.1} parent=35 // pred_check
          %p231 = pneg %p55
        $region38: #{tpu_custom_call.1} parent=35 // pred_check_branch
          %233 = sbr.rel (%p231) target = $region40
        $region39: #{tpu_custom_call.1} parent=35 // pred_region
          %235 = dma.done %s227, 128
        $region40: #{tpu_custom_call.1} parent=35 // pred_fallthru
          _
        // Predicated region
        $region41: #{tpu_custom_call.1} parent=35 // pred_check
          %p236 = pneg %p81
        $region42: #{tpu_custom_call.1} parent=35 // pred_check_branch
          %238 = sbr.rel (%p236) target = $region44
        $region43: #{tpu_custom_call.1} parent=35 // pred_region
          %240 = dma.done [#allocation6], 512
        $region44: #{tpu_custom_call.1} parent=35 // pred_fallthru
          _
        %s241 = sand.u32 %s42, 1
        %s242 = scalar_lea.sflag [#allocation3], %s241
        %s243 = sand.u32 %s42, 1
        %s244 = smul.addr %s243, 8
        %s245 = scalar_lea.vmem [#allocation2], %s244
        %p246 = pneg %p55
        %p247 = pneg %p52
        %p248 = pneg %p81
        %p249 = pneg %p78
        %p250 = pneg %p102
        %p251 = pneg %p99
        %p252 = scmp.lt.s32.totalorder %s27, 0
        %s253 = scalar_select %p252, %s27, 0
        %s254 = scalar_lea.vmem %s3, %s253
        %p255 = pneg %p128
        %p256 = pneg %p125
        %p257 = pneg %p156
        %p258 = pneg %p153
        %s259 = sand.u32 %s143, 1
        %s260 = scalar_lea.sflag [#allocation4], %s259
        %s261 = sand.u32 %s143, 1
        %s262 = smul.addr %s261, 8
        %s263 = scalar_lea.vmem [#allocation7], %s262
        %p264 = scmp.lt.s32.totalorder %s27, 0
        %s265 = scalar_select %p264, %s27, 0
        %s266 = scalar_lea.vmem %s3, %s265
        %v267 = vld [vmem:[%s230] sm:$0xff]
        %v268 = vld [vmem:[%s2] sm:$0x1]
        %v270 = vperm.slane %v268, 0
        %v272 = vmul.f32 %v267, %v270
        %v273 = vld [vmem:[#allocation5] sm:$0xff]
        %v274 = vld [vmem:[#allocation5 + $0x8] sm:$0xff]
        %v275 = vld [vmem:[#allocation5 + $0x10] sm:$0xff]
        %v276 = vld [vmem:[#allocation5 + $0x18] sm:$0xff]
        %v277 = vld [vmem:[%s266] sm:$0x1]
        %v279 = vperm.slane %v277, 0
        %vm281 = vcmask 261120
        %v283 = vsel %vm281, %v272, 0
        %285 = vmatpush.msra.mxu0 0.0
        %286 = vmatpush.msra.mxu0 0.0
        %287 = vmatpush.msra.mxu0 0.0
        %288 = vmatpush.msra.mxu0 0.0
        %289 = vmatpush.msra.mxu0 0.0
        %290 = vmatpush.msra.mxu0 0.0
        %291 = vmatpush.msra.mxu0 0.0
        %292 = vmatpush.msra.mxu0 0.0
        %293 = vmatpush.msra.mxu0 0.0
        %294 = vmatpush.msra.mxu0 0.0
        %295 = vmatpush.msra.mxu0 0.0
        %296 = vmatpush.msra.mxu0 0.0
        %297 = vmatpush.msra.mxu0 %v276
        %298 = vmatpush.msra.mxu0 %v275
        %299 = vmatpush.msra.mxu0 %v274
        %300 = vmatpush.msra.mxu0 %v273
        %301 = vmatmul.f32.gmra.mxu0 %v283
        %v302 = vpop.f32.mrf.mxu0
        %v303 = vadd.f32 %v279, %v302
        %304 = vdwg.mxu0
        %305 = vst [vmem:[%s263] sm:$0xff] %v303
        %s306 = sand.u32 %s143, 1
        %s307 = scalar_lea.sflag [#allocation4], %s306
        %s308 = sand.u32 %s143, 1
        %s309 = smul.addr %s308, 8
        %s310 = scalar_lea.vmem [#allocation7], %s309
        // Predicated region
        $region45: #{tpu_custom_call.1} parent=35 // pred_check
          %p311 = pneg %p153
        $region46: #{tpu_custom_call.1} parent=35 // pred_check_branch
          %313 = sbr.rel (%p311) target = $region48
        $region47: #{tpu_custom_call.1} parent=35 // pred_region
          %315 = vsyncadd %s307, 0
          %s316 = sadd.s32 %s27, %s26
          %s317 = smul.addr %s316, 8
          %s318 = scalar_lea.hbm %s4, %s317
          %s320 = sshll.u32 %s310, 4
          %s321 = int_to_ptr.vmem [resolvable:$true] %s320
          %s322 = sshll.u32 %s318, 4
          %s323 = int_to_ptr.hbm [resolvable:$true] %s322
          %325 = dma.vmem_to_hbm [thread:$0]  %s321, 128, %s323, %s307
        $region48: #{tpu_custom_call.1} parent=35 // pred_fallthru
          _
      $region36: #{tpu_custom_call.1} parent=5 // pred_fallthru
        _
      %p326 = scmp.le.s32.totalorder 2, %s17
      // Predicated region
      $region49: #{tpu_custom_call.1} parent=5 // pred_check
        %p327 = pneg %p326
      $region50: #{tpu_custom_call.1} parent=5 // pred_check_branch
        %329 = sbr.rel (%p327) target = $region52
      $region51: #{tpu_custom_call.1} parent=5 // pred_region
        %s330 = ssub.s32 %s17, 2
        // Predicated region
        $region53: #{tpu_custom_call.1} parent=51 // pred_check
          %p331 = pneg %p159
        $region54: #{tpu_custom_call.1} parent=51 // pred_check_branch
          %333 = sbr.rel (%p331) target = $region56
        $region55: #{tpu_custom_call.1} parent=51 // pred_region
          %s334 = sand.u32 %s144, 1
          %s335 = scalar_lea.sflag [#allocation4], %s334
          %s336 = sand.u32 %s144, 1
          %s337 = smul.addr %s336, 8
          %s338 = scalar_lea.vmem [#allocation7], %s337
          %340 = dma.done %s335, 128
        $region56: #{tpu_custom_call.1} parent=51 // pred_fallthru
          _
      $region52: #{tpu_custom_call.1} parent=5 // pred_fallthru
        _
    $region6: #{tpu_custom_call.1} parent=1 // loop_footer
      %s21 = sadd.s32 1, %s17
    $region7: #{tpu_custom_call.1} parent=1 // loop_footer_branch
      %16 = sbr.rel target = $region3
    $region8: #{tpu_custom_call.1} parent=1 // loop_exit
      _
    %341 = vsyncpa [#allocation3], 1
    %s342 = scalar_lea.sflag [#allocation3], 1
    %343 = vsyncpa %s342, 1
    %344 = vsyncpa [#allocation6], 1
    %345 = vsyncpa [#allocation4], 1
    %s346 = scalar_lea.sflag [#allocation4], 1
    %347 = vsyncpa %s346, 1

</llo_original>
